<compile_context>
chip_gen: v7x
topology: tpu7x:2x2x1
jax: 0.10.0
libtpu: 0.0.40
codegen_flags: <defaults>
</compile_context>

<pallas_src>
import jax
import jax.numpy as jnp
import numpy as np
from jax.experimental import pallas as pl
from jax.experimental.pallas import tpu as pltpu

BN_EPS = 1e-5
LANE = 128   # pad output feature dims to a full vreg lane width


# ----------------------------- Pallas kernel -------------------------------

def _full_spec(shape):
    nd = len(shape)
    return pl.BlockSpec(shape, lambda i, nd=nd: (0,) * nd)


def fused_gnn_kernel(xn_ref, xc_ref,
                     gn_ref, bn_ref, gc_ref, bc_ref,
                     adj_n_ref, adj_c_ref,
                     w_node_ref, b_node_ref,
                     w_rel_c_ref, w_root_c_ref, b_cstr_ref,
                     on_ref, oc_ref):
    def batch_norm(x_ref, gamma_ref, beta_ref):
        # single-pass training-mode BN: var = E[x^2] - mean^2,
        # gamma/beta folded into a precomputed scale/shift.
        x = x_ref[...].astype(jnp.float32)
        inv_n = 1.0 / x.shape[0]
        mean = jnp.sum(x, axis=0, keepdims=True) * inv_n
        ex2 = jnp.sum(x * x, axis=0, keepdims=True) * inv_n
        var = ex2 - mean * mean
        scale = gamma_ref[...] * jax.lax.rsqrt(var + BN_EPS)
        shift = beta_ref[...] - mean * scale
        return x * scale + shift

    xn = batch_norm(xn_ref, gn_ref, bn_ref)      # [n_var, d_var]  f32
    xc = batch_norm(xc_ref, gc_ref, bc_ref)      # [n_cstr, d_cstr] f32
    xn_b = xn.astype(jnp.bfloat16)
    xc_b = xc.astype(jnp.bfloat16)

    # ---- node path (out_dim >= d_src): aggregate first, then ONE merged
    #      matmul over the concatenated [agg | x_dst] operand.
    agg_n = jnp.dot(adj_n_ref[...], xc_b,
                    preferred_element_type=jnp.float32)          # [n_var, d_cstr]
    cat_n = jnp.concatenate([agg_n, xn], axis=-1).astype(jnp.bfloat16)
    out_n = jnp.dot(cat_n, w_node_ref[...],
                    preferred_element_type=jnp.float32)          # [n_var, LANE]
    out_n = out_n + b_node_ref[...]
    on_ref[...] = jnp.maximum(out_n, 0.0).astype(on_ref.dtype)   # fused ReLU

    # ---- cstr path (out_dim < d_src): project sources first so the dense
    #      adjacency matmul runs at the narrow output width.
    proj = jnp.dot(xn_b, w_rel_c_ref[...],
                   preferred_element_type=jnp.float32)           # [n_var, LANE]
    agg_c = jnp.dot(adj_c_ref[...], proj.astype(jnp.bfloat16),
                    preferred_element_type=jnp.float32)          # [n_cstr, LANE]
    out_c = agg_c + jnp.dot(xc_b, w_root_c_ref[...],
                            preferred_element_type=jnp.float32)
    out_c = out_c + b_cstr_ref[...]
    oc_ref[...] = jnp.maximum(out_c, 0.0).astype(oc_ref.dtype)   # fused ReLU


# ------------------------------- JAX glue ----------------------------------

def build_normalized_adjacency(edge_index, edge_attr, n_dst, n_src,
                               dst_row, src_row):
    # Dense A[dst, src] = sum of edge weights, row-normalized by in-degree
    # (edge count) -> weighted scatter-mean, as in GraphConv(aggr='mean').
    # TODO(synk): data-dependent scatter-add stays in JAX glue; for realistic
    # sparse graphs this should become a block-sparse layout consumed via
    # PrefetchScalarGridSpec instead of a dense adjacency.
    dst = edge_index[dst_row]
    src = edge_index[src_row]
    adj = jnp.zeros((n_dst, n_src), jnp.float32).at[dst, src].add(edge_attr)
    deg = jnp.zeros((n_dst,), jnp.float32).at[dst].add(1.0)
    return adj / jnp.maximum(deg, 1.0)[:, None]


def _pad_lanes(a, lanes=LANE):
    pad = lanes - a.shape[-1]
    return jnp.pad(a, [(0, 0)] * (a.ndim - 1) + [(0, pad)])


@jax.jit
def gnn_fwd(params, var_feats, cstr_feats, edge_index, edge_attr):
    n_var, d_var = var_feats.shape
    n_cstr, d_cstr = cstr_feats.shape
    out0 = params["node_w_rel_t"].shape[1]
    out1 = params["cstr_w_rel_t"].shape[1]

    # node_gnn: x=(x_cstr, x_node), edge_index rows = (cstr -> var)
    adj_node = build_normalized_adjacency(
        edge_index, edge_attr, n_dst=n_var, n_src=n_cstr,
        dst_row=1, src_row=0).astype(jnp.bfloat16)
    # cstr_gnn: x=(x_node, x_cstr), flipped edge_index = (var -> cstr)
    adj_cstr = build_normalized_adjacency(
        edge_index, edge_attr, n_dst=n_cstr, n_src=n_var,
        dst_row=0, src_row=1).astype(jnp.bfloat16)

    # node path: merged [W_rel ; W_root] weight, padded to full lane width
    w_node = _pad_lanes(jnp.concatenate(
        [params["node_w_rel_t"], params["node_w_root_t"]], axis=0)
    ).astype(jnp.bfloat16)                                       # [d_c+d_v, 128]
    b_node = _pad_lanes(params["node_b_rel"]).astype(jnp.float32)     # [1, 128]

    # cstr path (reordered): lane-padded rel/root weights + bias
    w_rel_c = _pad_lanes(params["cstr_w_rel_t"]).astype(jnp.bfloat16)   # [d_v,128]
    w_root_c = _pad_lanes(params["cstr_w_root_t"]).astype(jnp.bfloat16)  # [d_c,128]
    b_cstr = _pad_lanes(params["cstr_b_rel"]).astype(jnp.float32)        # [1, 128]

    args = (var_feats, cstr_feats,
            params["bn_node_gamma"], params["bn_node_beta"],
            params["bn_cstr_gamma"], params["bn_cstr_beta"],
            adj_node, adj_cstr,
            w_node, b_node,
            w_rel_c, w_root_c, b_cstr)

    out_n_pad, out_c_pad = pl.pallas_call(
        fused_gnn_kernel,
        out_shape=(jax.ShapeDtypeStruct((n_var, LANE), jnp.float32),
                   jax.ShapeDtypeStruct((n_cstr, LANE), jnp.float32)),
        grid=(1,),
        in_specs=[_full_spec(a.shape) for a in args],
        out_specs=(_full_spec((n_var, LANE)), _full_spec((n_cstr, LANE))),
        compiler_params=pltpu.CompilerParams(
            dimension_semantics=("arbitrary",)),
    )(*args)

    # slice the lane-padded outputs back to the logical widths
    return out_n_pad[:, :out0], out_c_pad[:, :out1]


# -------------------------- pure-JAX reference ------------------------------

def reference_fwd(params, var_feats, cstr_feats, edge_index, edge_attr):
    def bn(x, g, b):
        m = x.mean(0, keepdims=True)
        v = ((x - m) ** 2).mean(0, keepdims=True)
        return (x - m) / jnp.sqrt(v + BN_EPS) * g + b

    xn = bn(var_feats, params["bn_node_gamma"], params["bn_node_beta"])
    xc = bn(cstr_feats, params["bn_cstr_gamma"], params["bn_cstr_beta"])
    w = edge_attr[:, None]
    cstr_idx, var_idx = edge_index[0], edge_index[1]
    n_var, n_cstr = var_feats.shape[0], cstr_feats.shape[0]

    # node path (dst = variables, src = constraints)
    msg = xc[cstr_idx] * w
    s = jnp.zeros((n_var, xc.shape[1]), jnp.float32).at[var_idx].add(msg)
    deg = jnp.zeros((n_var,), jnp.float32).at[var_idx].add(1.0)
    agg = s / jnp.maximum(deg, 1.0)[:, None]
    node_out = jnp.maximum(agg @ params["node_w_rel_t"] + params["node_b_rel"]
                           + xn @ params["node_w_root_t"], 0.0)

    # cstr path (dst = constraints, src = variables)
    msg = xn[var_idx] * w
    s = jnp.zeros((n_cstr, xn.shape[1]), jnp.float32).at[cstr_idx].add(msg)
    deg = jnp.zeros((n_cstr,), jnp.float32).at[cstr_idx].add(1.0)
    agg = s / jnp.maximum(deg, 1.0)[:, None]
    cstr_out = jnp.maximum(agg @ params["cstr_w_rel_t"] + params["cstr_b_rel"]
                           + xc @ params["cstr_w_root_t"], 0.0)
    return node_out, cstr_out


# ----------------------------------- main -----------------------------------

if __name__ == "__main__":
    key = jax.random.PRNGKey(0)
    keys = jax.random.split(key, 16)

    n_var, d_var = 32, 16      # in_dim[0]
    n_cstr, d_cstr = 24, 8     # in_dim[1]
    n_edges = 64
    out_dim = (16, 8)          # out_dim per node type

    var_feats = jax.random.normal(keys[0], (n_var, d_var), jnp.float32)
    cstr_feats = jax.random.normal(keys[1], (n_cstr, d_cstr), jnp.float32)
    cstr_idx = jax.random.randint(keys[2], (n_edges,), 0, n_cstr)
    var_idx = jax.random.randint(keys[3], (n_edges,), 0, n_var)
    edge_index = jnp.stack([cstr_idx, var_idx])          # [2, E]
    edge_attr = jax.random.normal(keys[4], (n_edges,), jnp.float32)

    def lin(k, fan_in, shape):
        return jax.random.normal(k, shape, jnp.float32) / np.sqrt(fan_in)

    params = {
        # BatchNorm params (PyTorch init is gamma=1, beta=0; perturbed for a
        # non-trivial, still deterministic test)
        "bn_node_gamma": 1.0 + 0.1 * jax.random.normal(keys[5], (1, d_var)),
        "bn_node_beta": 0.1 * jax.random.normal(keys[6], (1, d_var)),
        "bn_cstr_gamma": 1.0 + 0.1 * jax.random.normal(keys[7], (1, d_cstr)),
        "bn_cstr_beta": 0.1 * jax.random.normal(keys[8], (1, d_cstr)),
        # node_gnn = GraphConv(in=(d_cstr, d_var), out=out_dim[0])
        "node_w_rel_t": lin(keys[9], d_cstr, (d_cstr, out_dim[0])),
        "node_b_rel": lin(keys[10], d_cstr, (1, out_dim[0])),
        "node_w_root_t": lin(keys[11], d_var, (d_var, out_dim[0])),
        # cstr_gnn = GraphConv(in=(d_var, d_cstr), out=out_dim[1])
        "cstr_w_rel_t": lin(keys[12], d_var, (d_var, out_dim[1])),
        "cstr_b_rel": lin(keys[13], d_var, (1, out_dim[1])),
        "cstr_w_root_t": lin(keys[14], d_cstr, (d_cstr, out_dim[1])),
    }

    x_node_out, x_cstr_out = gnn_fwd(params, var_feats, cstr_feats,
                                     edge_index, edge_attr)
    jax.block_until_ready((x_node_out, x_cstr_out))

    ref_node, ref_cstr = reference_fwd(params, var_feats, cstr_feats,
                                       edge_index, edge_attr)
    assert x_node_out.shape == (n_var, out_dim[0])
    assert x_cstr_out.shape == (n_cstr, out_dim[1])
    # tolerance widened slightly vs. pure-f32: MXU operands are bf16 with f32
    # accumulation, while the reference runs entirely in f32.
    np.testing.assert_allclose(np.asarray(x_node_out), np.asarray(ref_node),
                               rtol=2e-2, atol=2e-2)
    np.testing.assert_allclose(np.asarray(x_cstr_out), np.asarray(ref_cstr),
                               rtol=2e-2, atol=2e-2)

    print("KERNEL_OK")
</pallas_src>

<mosaic_0001>
module attributes {stable_mosaic.version = 11 : i64} {
  func.func private @main(%arg0: i32) attributes {dimension_semantics = [#tpu.dimension_semantics<core_parallel>], iteration_bounds = array<i64: 2>, tpu.core_type = #tpu.core_type<sc_scalar_subcore>, window_params = []} {
    return
  }
}

module attributes {stable_mosaic.version = 11 : i64} {
  func.func private @main(%arg0: i32) attributes {dimension_semantics = [#tpu.dimension_semantics<core_parallel>], iteration_bounds = array<i64: 2>, tpu.core_type = #tpu.core_type<sc_scalar_subcore>, window_params = []} {
    return
  }
}

module attributes {stable_mosaic.version = 11 : i64} {
  func.func @fused_gnn_kernel(%arg0: i32, %arg1: memref<32x16xf32, #tpu.memory_space<vmem>>, %arg2: memref<24x8xf32, #tpu.memory_space<vmem>>, %arg3: memref<1x16xf32, #tpu.memory_space<vmem>>, %arg4: memref<1x16xf32, #tpu.memory_space<vmem>>, %arg5: memref<1x8xf32, #tpu.memory_space<vmem>>, %arg6: memref<1x8xf32, #tpu.memory_space<vmem>>, %arg7: memref<32x24xbf16, #tpu.memory_space<vmem>>, %arg8: memref<24x32xbf16, #tpu.memory_space<vmem>>, %arg9: memref<24x128xbf16, #tpu.memory_space<vmem>>, %arg10: memref<1x128xf32, #tpu.memory_space<vmem>>, %arg11: memref<16x128xbf16, #tpu.memory_space<vmem>>, %arg12: memref<8x128xbf16, #tpu.memory_space<vmem>>, %arg13: memref<1x128xf32, #tpu.memory_space<vmem>>, %arg14: memref<32x128xf32, #tpu.memory_space<vmem>>, %arg15: memref<24x128xf32, #tpu.memory_space<vmem>>) attributes {dimension_semantics = [#tpu.dimension_semantics<arbitrary>], iteration_bounds = array<i64: 1>, scalar_prefetch = 0 : i64, scratch_operands = 0 : i64, tpu.core_type = #tpu.core_type<tc>, window_params = [{pipeline_mode = #tpu.pipeline_mode<synchronous>, transform_indices = @transform_0, window_bounds = array<i64: 32, 16>}, {pipeline_mode = #tpu.pipeline_mode<synchronous>, transform_indices = @transform_1, window_bounds = array<i64: 24, 8>}, {pipeline_mode = #tpu.pipeline_mode<synchronous>, transform_indices = @transform_2, window_bounds = array<i64: 1, 16>}, {pipeline_mode = #tpu.pipeline_mode<synchronous>, transform_indices = @transform_3, window_bounds = array<i64: 1, 16>}, {pipeline_mode = #tpu.pipeline_mode<synchronous>, transform_indices = @transform_4, window_bounds = array<i64: 1, 8>}, {pipeline_mode = #tpu.pipeline_mode<synchronous>, transform_indices = @transform_5, window_bounds = array<i64: 1, 8>}, {pipeline_mode = #tpu.pipeline_mode<synchronous>, transform_indices = @transform_6, window_bounds = array<i64: 32, 24>}, {pipeline_mode = #tpu.pipeline_mode<synchronous>, transform_indices = @transform_7, window_bounds = array<i64: 24, 32>}, {pipeline_mode = #tpu.pipeline_mode<synchronous>, transform_indices = @transform_8, window_bounds = array<i64: 24, 128>}, {pipeline_mode = #tpu.pipeline_mode<synchronous>, transform_indices = @transform_9, window_bounds = array<i64: 1, 128>}, {pipeline_mode = #tpu.pipeline_mode<synchronous>, transform_indices = @transform_10, window_bounds = array<i64: 16, 128>}, {pipeline_mode = #tpu.pipeline_mode<synchronous>, transform_indices = @transform_11, window_bounds = array<i64: 8, 128>}, {pipeline_mode = #tpu.pipeline_mode<synchronous>, transform_indices = @transform_12, window_bounds = array<i64: 1, 128>}, {pipeline_mode = #tpu.pipeline_mode<synchronous>, transform_indices = @transform_13, window_bounds = array<i64: 32, 128>}, {pipeline_mode = #tpu.pipeline_mode<synchronous>, transform_indices = @transform_14, window_bounds = array<i64: 24, 128>}]} {
    %c0 = arith.constant 0 : index
    %c0_0 = arith.constant 0 : index
    %0 = vector.load %arg1[%c0, %c0_0] : memref<32x16xf32, #tpu.memory_space<vmem>>, vector<32x16xf32>
    %cst = arith.constant dense<0.000000e+00> : vector<16xf32>
    %1 = vector.multi_reduction <add>, %0, %cst [0] : vector<32x16xf32> to vector<16xf32>
    %2 = vector.shape_cast %1 : vector<16xf32> to vector<1x16xf32>
    %cst_1 = arith.constant 3.125000e-02 : f32
    %3 = vector.broadcast %cst_1 : f32 to vector<1x16xf32>
    %4 = arith.mulf %2, %3 : vector<1x16xf32>
    %5 = arith.mulf %0, %0 : vector<32x16xf32>
    %cst_2 = arith.constant dense<0.000000e+00> : vector<16xf32>
    %6 = vector.multi_reduction <add>, %5, %cst_2 [0] : vector<32x16xf32> to vector<16xf32>
    %7 = vector.shape_cast %6 : vector<16xf32> to vector<1x16xf32>
    %cst_3 = arith.constant 3.125000e-02 : f32
    %8 = vector.broadcast %cst_3 : f32 to vector<1x16xf32>
    %9 = arith.mulf %7, %8 : vector<1x16xf32>
    %10 = arith.mulf %4, %4 : vector<1x16xf32>
    %11 = arith.subf %9, %10 : vector<1x16xf32>
    %c0_4 = arith.constant 0 : index
    %c0_5 = arith.constant 0 : index
    %12 = vector.load %arg3[%c0_4, %c0_5] : memref<1x16xf32, #tpu.memory_space<vmem>>, vector<1x16xf32>
    %cst_6 = arith.constant 9.99999974E-6 : f32
    %13 = vector.broadcast %cst_6 : f32 to vector<1x16xf32>
    %14 = arith.addf %11, %13 : vector<1x16xf32>
    %15 = math.rsqrt %14 : vector<1x16xf32>
    %16 = arith.mulf %12, %15 : vector<1x16xf32>
    %c0_7 = arith.constant 0 : index
    %c0_8 = arith.constant 0 : index
    %17 = vector.load %arg4[%c0_7, %c0_8] : memref<1x16xf32, #tpu.memory_space<vmem>>, vector<1x16xf32>
    %18 = arith.mulf %4, %16 : vector<1x16xf32>
    %19 = arith.subf %17, %18 : vector<1x16xf32>
    %20 = vector.broadcast %16 : vector<1x16xf32> to vector<32x16xf32>
    %21 = arith.mulf %0, %20 : vector<32x16xf32>
    %22 = vector.broadcast %19 : vector<1x16xf32> to vector<32x16xf32>
    %23 = arith.addf %21, %22 : vector<32x16xf32>
    %c0_9 = arith.constant 0 : index
    %c0_10 = arith.constant 0 : index
    %24 = vector.load %arg2[%c0_9, %c0_10] : memref<24x8xf32, #tpu.memory_space<vmem>>, vector<24x8xf32>
    %cst_11 = arith.constant dense<0.000000e+00> : vector<8xf32>
    %25 = vector.multi_reduction <add>, %24, %cst_11 [0] : vector<24x8xf32> to vector<8xf32>
    %26 = vector.shape_cast %25 : vector<8xf32> to vector<1x8xf32>
    %cst_12 = arith.constant 0.0416666679 : f32
    %27 = vector.broadcast %cst_12 : f32 to vector<1x8xf32>
    %28 = arith.mulf %26, %27 : vector<1x8xf32>
    %29 = arith.mulf %24, %24 : vector<24x8xf32>
    %cst_13 = arith.constant dense<0.000000e+00> : vector<8xf32>
    %30 = vector.multi_reduction <add>, %29, %cst_13 [0] : vector<24x8xf32> to vector<8xf32>
    %31 = vector.shape_cast %30 : vector<8xf32> to vector<1x8xf32>
    %cst_14 = arith.constant 0.0416666679 : f32
    %32 = vector.broadcast %cst_14 : f32 to vector<1x8xf32>
    %33 = arith.mulf %31, %32 : vector<1x8xf32>
    %34 = arith.mulf %28, %28 : vector<1x8xf32>
    %35 = arith.subf %33, %34 : vector<1x8xf32>
    %c0_15 = arith.constant 0 : index
    %c0_16 = arith.constant 0 : index
    %36 = vector.load %arg5[%c0_15, %c0_16] : memref<1x8xf32, #tpu.memory_space<vmem>>, vector<1x8xf32>
    %cst_17 = arith.constant 9.99999974E-6 : f32
    %37 = vector.broadcast %cst_17 : f32 to vector<1x8xf32>
    %38 = arith.addf %35, %37 : vector<1x8xf32>
    %39 = math.rsqrt %38 : vector<1x8xf32>
    %40 = arith.mulf %36, %39 : vector<1x8xf32>
    %c0_18 = arith.constant 0 : index
    %c0_19 = arith.constant 0 : index
    %41 = vector.load %arg6[%c0_18, %c0_19] : memref<1x8xf32, #tpu.memory_space<vmem>>, vector<1x8xf32>
    %42 = arith.mulf %28, %40 : vector<1x8xf32>
    %43 = arith.subf %41, %42 : vector<1x8xf32>
    %44 = vector.broadcast %40 : vector<1x8xf32> to vector<24x8xf32>
    %45 = arith.mulf %24, %44 : vector<24x8xf32>
    %46 = vector.broadcast %43 : vector<1x8xf32> to vector<24x8xf32>
    %47 = arith.addf %45, %46 : vector<24x8xf32>
    %48 = arith.truncf %23 : vector<32x16xf32> to vector<32x16xbf16>
    %49 = arith.truncf %47 : vector<24x8xf32> to vector<24x8xbf16>
    %c0_20 = arith.constant 0 : index
    %c0_21 = arith.constant 0 : index
    %50 = vector.load %arg7[%c0_20, %c0_21] : memref<32x24xbf16, #tpu.memory_space<vmem>>, vector<32x24xbf16>
    %cst_22 = arith.constant dense<0.000000e+00> : vector<32x8xf32>
    %51 = tpu.matmul %50, %49, %cst_22 {dimension_numbers = #tpu.dot_dimension_numbers<[1], [0], [0], [1], [0, 0, 1, 1], [], []>} : vector<32x24xbf16>, vector<24x8xbf16>, vector<32x8xf32> -> vector<32x8xf32>
    %52 = tpu.concatenate %51, %23 in 1 : vector<32x8xf32>, vector<32x16xf32> -> vector<32x24xf32>
    %53 = arith.truncf %52 : vector<32x24xf32> to vector<32x24xbf16>
    %c0_23 = arith.constant 0 : index
    %c0_24 = arith.constant 0 : index
    %54 = vector.load %arg9[%c0_23, %c0_24] : memref<24x128xbf16, #tpu.memory_space<vmem>>, vector<24x128xbf16>
    %cst_25 = arith.constant dense<0.000000e+00> : vector<32x128xf32>
    %55 = tpu.matmul %53, %54, %cst_25 {dimension_numbers = #tpu.dot_dimension_numbers<[1], [0], [0], [1], [0, 0, 1, 1], [], []>} : vector<32x24xbf16>, vector<24x128xbf16>, vector<32x128xf32> -> vector<32x128xf32>
    %c0_26 = arith.constant 0 : index
    %c0_27 = arith.constant 0 : index
    %56 = vector.load %arg10[%c0_26, %c0_27] : memref<1x128xf32, #tpu.memory_space<vmem>>, vector<1x128xf32>
    %57 = vector.broadcast %56 : vector<1x128xf32> to vector<32x128xf32>
    %58 = arith.addf %55, %57 : vector<32x128xf32>
    %cst_28 = arith.constant 0.000000e+00 : f32
    %59 = vector.broadcast %cst_28 : f32 to vector<32x128xf32>
    %60 = arith.maximumf %58, %59 : vector<32x128xf32>
    %c0_29 = arith.constant 0 : index
    %c0_30 = arith.constant 0 : index
    %61 = vector.load %arg14[%c0_29, %c0_30] : memref<32x128xf32, #tpu.memory_space<vmem>>, vector<32x128xf32>
    tpu.vector_store %arg14[%c0_29, %c0_30], %60 {strides = array<i32>} : memref<32x128xf32, #tpu.memory_space<vmem>>, vector<32x128xf32>,
    %c0_31 = arith.constant 0 : index
    %c0_32 = arith.constant 0 : index
    %62 = vector.load %arg11[%c0_31, %c0_32] : memref<16x128xbf16, #tpu.memory_space<vmem>>, vector<16x128xbf16>
    %cst_33 = arith.constant dense<0.000000e+00> : vector<32x128xf32>
    %63 = tpu.matmul %48, %62, %cst_33 {dimension_numbers = #tpu.dot_dimension_numbers<[1], [0], [0], [1], [0, 0, 1, 1], [], []>} : vector<32x16xbf16>, vector<16x128xbf16>, vector<32x128xf32> -> vector<32x128xf32>
    %c0_34 = arith.constant 0 : index
    %c0_35 = arith.constant 0 : index
    %64 = vector.load %arg8[%c0_34, %c0_35] : memref<24x32xbf16, #tpu.memory_space<vmem>>, vector<24x32xbf16>
    %65 = arith.truncf %63 : vector<32x128xf32> to vector<32x128xbf16>
    %cst_36 = arith.constant dense<0.000000e+00> : vector<24x128xf32>
    %66 = tpu.matmul %64, %65, %cst_36 {dimension_numbers = #tpu.dot_dimension_numbers<[1], [0], [0], [1], [0, 0, 1, 1], [], []>} : vector<24x32xbf16>, vector<32x128xbf16>, vector<24x128xf32> -> vector<24x128xf32>
    %c0_37 = arith.constant 0 : index
    %c0_38 = arith.constant 0 : index
    %67 = vector.load %arg12[%c0_37, %c0_38] : memref<8x128xbf16, #tpu.memory_space<vmem>>, vector<8x128xbf16>
    %cst_39 = arith.constant dense<0.000000e+00> : vector<24x128xf32>
    %68 = tpu.matmul %49, %67, %cst_39 {dimension_numbers = #tpu.dot_dimension_numbers<[1], [0], [0], [1], [0, 0, 1, 1], [], []>} : vector<24x8xbf16>, vector<8x128xbf16>, vector<24x128xf32> -> vector<24x128xf32>
    %69 = arith.addf %66, %68 : vector<24x128xf32>
    %c0_40 = arith.constant 0 : index
    %c0_41 = arith.constant 0 : index
    %70 = vector.load %arg13[%c0_40, %c0_41] : memref<1x128xf32, #tpu.memory_space<vmem>>, vector<1x128xf32>
    %71 = vector.broadcast %70 : vector<1x128xf32> to vector<24x128xf32>
    %72 = arith.addf %69, %71 : vector<24x128xf32>
    %cst_42 = arith.constant 0.000000e+00 : f32
    %73 = vector.broadcast %cst_42 : f32 to vector<24x128xf32>
    %74 = arith.maximumf %72, %73 : vector<24x128xf32>
    %c0_43 = arith.constant 0 : index
    %c0_44 = arith.constant 0 : index
    %75 = vector.load %arg15[%c0_43, %c0_44] : memref<24x128xf32, #tpu.memory_space<vmem>>, vector<24x128xf32>
    tpu.vector_store %arg15[%c0_43, %c0_44], %74 {strides = array<i32>} : memref<24x128xf32, #tpu.memory_space<vmem>>, vector<24x128xf32>,
    return
  }
  func.func @transform_0(%arg0: i32) -> (i32, i32) {
    %c0_i32 = arith.constant 0 : i32
    %c0_i32_0 = arith.constant 0 : i32
    %c0_i32_1 = arith.constant 0 : i32
    return %c0_i32, %c0_i32_0 : i32, i32
  }
  func.func @transform_1(%arg0: i32) -> (i32, i32) {
    %c0_i32 = arith.constant 0 : i32
    %c0_i32_0 = arith.constant 0 : i32
    %c0_i32_1 = arith.constant 0 : i32
    return %c0_i32, %c0_i32_0 : i32, i32
  }
  func.func @transform_2(%arg0: i32) -> (i32, i32) {
    %c0_i32 = arith.constant 0 : i32
    %c0_i32_0 = arith.constant 0 : i32
    %c0_i32_1 = arith.constant 0 : i32
    return %c0_i32, %c0_i32_0 : i32, i32
  }
  func.func @transform_3(%arg0: i32) -> (i32, i32) {
    %c0_i32 = arith.constant 0 : i32
    %c0_i32_0 = arith.constant 0 : i32
    %c0_i32_1 = arith.constant 0 : i32
    return %c0_i32, %c0_i32_0 : i32, i32
  }
  func.func @transform_4(%arg0: i32) -> (i32, i32) {
    %c0_i32 = arith.constant 0 : i32
    %c0_i32_0 = arith.constant 0 : i32
    %c0_i32_1 = arith.constant 0 : i32
    return %c0_i32, %c0_i32_0 : i32, i32
  }
  func.func @transform_5(%arg0: i32) -> (i32, i32) {
    %c0_i32 = arith.constant 0 : i32
    %c0_i32_0 = arith.constant 0 : i32
    %c0_i32_1 = arith.constant 0 : i32
    return %c0_i32, %c0_i32_0 : i32, i32
  }
  func.func @transform_6(%arg0: i32) -> (i32, i32) {
    %c0_i32 = arith.constant 0 : i32
    %c0_i32_0 = arith.constant 0 : i32
    %c0_i32_1 = arith.constant 0 : i32
    return %c0_i32, %c0_i32_0 : i32, i32
  }
  func.func @transform_7(%arg0: i32) -> (i32, i32) {
    %c0_i32 = arith.constant 0 : i32
    %c0_i32_0 = arith.constant 0 : i32
    %c0_i32_1 = arith.constant 0 : i32
    return %c0_i32, %c0_i32_0 : i32, i32
  }
  func.func @transform_8(%arg0: i32) -> (i32, i32) {
    %c0_i32 = arith.constant 0 : i32
    %c0_i32_0 = arith.constant 0 : i32
    %c0_i32_1 = arith.constant 0 : i32
    return %c0_i32, %c0_i32_0 : i32, i32
  }
  func.func @transform_9(%arg0: i32) -> (i32, i32) {
    %c0_i32 = arith.constant 0 : i32
    %c0_i32_0 = arith.constant 0 : i32
    %c0_i32_1 = arith.constant 0 : i32
    return %c0_i32, %c0_i32_0 : i32, i32
  }
  func.func @transform_10(%arg0: i32) -> (i32, i32) {
    %c0_i32 = arith.constant 0 : i32
    %c0_i32_0 = arith.constant 0 : i32
    %c0_i32_1 = arith.constant 0 : i32
    return %c0_i32, %c0_i32_0 : i32, i32
  }
  func.func @transform_11(%arg0: i32) -> (i32, i32) {
    %c0_i32 = arith.constant 0 : i32
    %c0_i32_0 = arith.constant 0 : i32
    %c0_i32_1 = arith.constant 0 : i32
    return %c0_i32, %c0_i32_0 : i32, i32
  }
  func.func @transform_12(%arg0: i32) -> (i32, i32) {
    %c0_i32 = arith.constant 0 : i32
    %c0_i32_0 = arith.constant 0 : i32
    %c0_i32_1 = arith.constant 0 : i32
    return %c0_i32, %c0_i32_0 : i32, i32
  }
  func.func @transform_13(%arg0: i32) -> (i32, i32) {
    %c0_i32 = arith.constant 0 : i32
    %c0_i32_0 = arith.constant 0 : i32
    %c0_i32_1 = arith.constant 0 : i32
    return %c0_i32, %c0_i32_0 : i32, i32
  }
  func.func @transform_14(%arg0: i32) -> (i32, i32) {
    %c0_i32 = arith.constant 0 : i32
    %c0_i32_0 = arith.constant 0 : i32
    %c0_i32_1 = arith.constant 0 : i32
    return %c0_i32, %c0_i32_0 : i32, i32
  }
}

</mosaic_0001>

<llo_original>
// kernel: gnn_fwd.1
$region0: #{gnn_fwd.1}
  #allocation0 [shape = 'u32[]', space=smem, size = 0x4, offset = 0x4, fixed_abs, tag = 'smem constant byte address 0x4 - core index']
  #allocation1 [shape = 'u32[144,128]{1,0:T(1,128)}', space=vmem, size = 0x12000, scoped, tag = 'internal scratch']
  %s0 = inlined_call_operand.vmem [shape: f32[32,16], index: 0, kind: input, shape index: {}]
  %s1 = inlined_call_operand.vmem [shape: f32[24,8], index: 1, kind: input, shape index: {}]
  %s2 = inlined_call_operand.vmem [shape: f32[1,16], index: 2, kind: input, shape index: {}]
  %s3 = inlined_call_operand.vmem [shape: f32[1,16], index: 3, kind: input, shape index: {}]
  %s4 = inlined_call_operand.vmem [shape: f32[1,8], index: 4, kind: input, shape index: {}]
  %s5 = inlined_call_operand.vmem [shape: f32[1,8], index: 5, kind: input, shape index: {}]
  %s6 = inlined_call_operand.vmem [shape: bf16[32,24], index: 6, kind: input, shape index: {}]
  %s7 = inlined_call_operand.vmem [shape: bf16[24,32], index: 7, kind: input, shape index: {}]
  %s8 = inlined_call_operand.vmem [shape: bf16[24,128], index: 8, kind: input, shape index: {}]
  %s9 = inlined_call_operand.vmem [shape: f32[1,128], index: 9, kind: input, shape index: {}]
  %s10 = inlined_call_operand.vmem [shape: bf16[16,128], index: 10, kind: input, shape index: {}]
  %s11 = inlined_call_operand.vmem [shape: bf16[8,128], index: 11, kind: input, shape index: {}]
  %s12 = inlined_call_operand.vmem [shape: f32[1,128], index: 12, kind: input, shape index: {}]
  %s13 = inlined_call_operand.vmem [shape: f32[32,128], index: 13, kind: output, shape index: {0}]
  %s14 = inlined_call_operand.vmem [shape: f32[24,128], index: 14, kind: output, shape index: {1}]
  %15 = xla_tuple %s13, %s14
  %s16 = sld [smem:[#allocation0]]
  $region70: #{gnn_fwd.1} parent=0
    _
  %s18 = ssub.s32 1, %s16
  %s19 = scalar_select 0, %s18, %s16
  // Predicated region
  $region2: #{gnn_fwd.1} parent=0 // pred_check
    _
  $region3: #{gnn_fwd.1} parent=0 // pred_check_branch
    %21 = sbr.rel (0) target = $region5
  $region4: #{gnn_fwd.1} parent=0 // pred_region
    _
  $region5: #{gnn_fwd.1} parent=0 // pred_fallthru
    _
  // Predicated region
  $region6: #{gnn_fwd.1} parent=0 // pred_check
    _
  $region7: #{gnn_fwd.1} parent=0 // pred_check_branch
    %23 = sbr.rel (0) target = $region9
  $region8: #{gnn_fwd.1} parent=0 // pred_region
    _
  $region9: #{gnn_fwd.1} parent=0 // pred_fallthru
    _
  // Predicated region
  $region10: #{gnn_fwd.1} parent=0 // pred_check
    _
  $region11: #{gnn_fwd.1} parent=0 // pred_check_branch
    %25 = sbr.rel (0) target = $region13
  $region12: #{gnn_fwd.1} parent=0 // pred_region
    _
  $region13: #{gnn_fwd.1} parent=0 // pred_fallthru
    _
  // Predicated region
  $region14: #{gnn_fwd.1} parent=0 // pred_check
    _
  $region15: #{gnn_fwd.1} parent=0 // pred_check_branch
    %27 = sbr.rel (0) target = $region17
  $region16: #{gnn_fwd.1} parent=0 // pred_region
    _
  $region17: #{gnn_fwd.1} parent=0 // pred_fallthru
    _
  // Predicated region
  $region18: #{gnn_fwd.1} parent=0 // pred_check
    _
  $region19: #{gnn_fwd.1} parent=0 // pred_check_branch
    %29 = sbr.rel (0) target = $region21
  $region20: #{gnn_fwd.1} parent=0 // pred_region
    _
  $region21: #{gnn_fwd.1} parent=0 // pred_fallthru
    _
  // Predicated region
  $region22: #{gnn_fwd.1} parent=0 // pred_check
    _
  $region23: #{gnn_fwd.1} parent=0 // pred_check_branch
    %31 = sbr.rel (0) target = $region25
  $region24: #{gnn_fwd.1} parent=0 // pred_region
    _
  $region25: #{gnn_fwd.1} parent=0 // pred_fallthru
    _
  // Predicated region
  $region26: #{gnn_fwd.1} parent=0 // pred_check
    _
  $region27: #{gnn_fwd.1} parent=0 // pred_check_branch
    %33 = sbr.rel (0) target = $region29
  $region28: #{gnn_fwd.1} parent=0 // pred_region
    _
  $region29: #{gnn_fwd.1} parent=0 // pred_fallthru
    _
  // Predicated region
  $region30: #{gnn_fwd.1} parent=0 // pred_check
    _
  $region31: #{gnn_fwd.1} parent=0 // pred_check_branch
    %35 = sbr.rel (0) target = $region33
  $region32: #{gnn_fwd.1} parent=0 // pred_region
    _
  $region33: #{gnn_fwd.1} parent=0 // pred_fallthru
    _
  // Predicated region
  $region34: #{gnn_fwd.1} parent=0 // pred_check
    _
  $region35: #{gnn_fwd.1} parent=0 // pred_check_branch
    %37 = sbr.rel (0) target = $region37
  $region36: #{gnn_fwd.1} parent=0 // pred_region
    _
  $region37: #{gnn_fwd.1} parent=0 // pred_fallthru
    _
  // Predicated region
  $region38: #{gnn_fwd.1} parent=0 // pred_check
    _
  $region39: #{gnn_fwd.1} parent=0 // pred_check_branch
    %39 = sbr.rel (0) target = $region41
  $region40: #{gnn_fwd.1} parent=0 // pred_region
    _
  $region41: #{gnn_fwd.1} parent=0 // pred_fallthru
    _
  // Predicated region
  $region42: #{gnn_fwd.1} parent=0 // pred_check
    _
  $region43: #{gnn_fwd.1} parent=0 // pred_check_branch
    %41 = sbr.rel (0) target = $region45
  $region44: #{gnn_fwd.1} parent=0 // pred_region
    _
  $region45: #{gnn_fwd.1} parent=0 // pred_fallthru
    _
  // Predicated region
  $region46: #{gnn_fwd.1} parent=0 // pred_check
    _
  $region47: #{gnn_fwd.1} parent=0 // pred_check_branch
    %43 = sbr.rel (0) target = $region49
  $region48: #{gnn_fwd.1} parent=0 // pred_region
    _
  $region49: #{gnn_fwd.1} parent=0 // pred_fallthru
    _
  // Predicated region
  $region50: #{gnn_fwd.1} parent=0 // pred_check
    _
  $region51: #{gnn_fwd.1} parent=0 // pred_check_branch
    %45 = sbr.rel (0) target = $region53
  $region52: #{gnn_fwd.1} parent=0 // pred_region
    _
  $region53: #{gnn_fwd.1} parent=0 // pred_fallthru
    _
  %v47 = vld [vmem:[%s0] sm:$0xff]
  %v48 = vld [vmem:[%s0 + $0x8] sm:$0xff]
  %v49 = vld [vmem:[%s0 + $0x10] sm:$0xff]
  %v50 = vld [vmem:[%s0 + $0x18] sm:$0xff]
  %vm51 = vcmask 130048
  %v52 = vsel %vm51, %v47, 0.0
  %v53 = vsel %vm51, %v48, 0.0
  %v54 = vadd.f32 %v52, %v53
  %v55 = vsel %vm51, %v49, 0.0
  %v56 = vadd.f32 %v54, %v55
  %v57 = vsel %vm51, %v50, 0.0
  %v58 = vadd.f32 %v56, %v57
  %v59 = vrot.slane %v58, 4
  %v60 = vadd.f32 %v58, %v59
  %v61 = vrot.slane %v60, 2
  %v62 = vadd.f32 %v60, %v61
  %v63 = vrot.slane %v62, 1
  %v64 = vadd.f32 %v62, %v63
  %v65 = vmul.f32 %v64, 0.03125
  %v66 = vmul.f32 %v47, %v47
  %v67 = vmul.f32 %v48, %v48
  %v68 = vmul.f32 %v49, %v49
  %v69 = vmul.f32 %v50, %v50
  %v70 = vsel %vm51, %v66, 0.0
  %v71 = vsel %vm51, %v67, 0.0
  %v72 = vadd.f32 %v70, %v71
  %v73 = vsel %vm51, %v68, 0.0
  %v74 = vadd.f32 %v72, %v73
  %v75 = vsel %vm51, %v69, 0.0
  %v76 = vadd.f32 %v74, %v75
  %v77 = vrot.slane %v76, 4
  %v78 = vadd.f32 %v76, %v77
  %v79 = vrot.slane %v78, 2
  %v80 = vadd.f32 %v78, %v79
  %v81 = vrot.slane %v80, 1
  %v82 = vadd.f32 %v80, %v81
  %v83 = vmul.f32 %v82, 0.03125
  %v84 = vmul.f32 %v65, %v65
  %v85 = vsub.f32 %v83, %v84
  %v86 = vld [vmem:[%s2] sm:$0x1]
  %v87 = vadd.f32 %v85, 1e-05
  %v88 = vrsqrt.pop %v87
  %v89 = vmul.f32 %v86, %v88
  %v90 = vld [vmem:[%s3] sm:$0x1]
  %v91 = vmul.f32 %v65, %v89
  %v92 = vsub.f32 %v90, %v91
  %v94 = vlaneseq
  %v95 = vshrl.u32 %v94, 7
  %v96 = vsub.s32 0, %v95
  %v97 = vrot.slane %v89, %v96
  %v99 = vmul.f32 %v47, %v97
  %v100 = vmul.f32 %v48, %v97
  %v101 = vmul.f32 %v49, %v97
  %v102 = vmul.f32 %v50, %v97
  %v104 = vlaneseq
  %v105 = vshrl.u32 %v104, 7
  %v106 = vsub.s32 0, %v105
  %v107 = vrot.slane %v92, %v106
  %v109 = vadd.f32 %v99, %v107
  %v110 = vadd.f32 %v100, %v107
  %v111 = vadd.f32 %v101, %v107
  %v112 = vadd.f32 %v102, %v107
  %v113 = vld [vmem:[%s1] sm:$0xff]
  %v114 = vld [vmem:[%s1 + $0x8] sm:$0xff]
  %v115 = vld [vmem:[%s1 + $0x10] sm:$0xff]
  %vm116 = vcmask 64512
  %v117 = vsel %vm116, %v113, 0.0
  %v118 = vsel %vm116, %v114, 0.0
  %v119 = vadd.f32 %v117, %v118
  %v120 = vsel %vm116, %v115, 0.0
  %v121 = vadd.f32 %v119, %v120
  %v122 = vrot.slane %v121, 4
  %v123 = vadd.f32 %v121, %v122
  %v124 = vrot.slane %v123, 2
  %v125 = vadd.f32 %v123, %v124
  %v126 = vrot.slane %v125, 1
  %v127 = vadd.f32 %v125, %v126
  %v128 = vmul.f32 %v127, 0.041666668
  %v129 = vmul.f32 %v113, %v113
  %v130 = vmul.f32 %v114, %v114
  %v131 = vmul.f32 %v115, %v115
  %v132 = vsel %vm116, %v129, 0.0
  %v133 = vsel %vm116, %v130, 0.0
  %v134 = vadd.f32 %v132, %v133
  %v135 = vsel %vm116, %v131, 0.0
  %v136 = vadd.f32 %v134, %v135
  %v137 = vrot.slane %v136, 4
  %v138 = vadd.f32 %v136, %v137
  %v139 = vrot.slane %v138, 2
  %v140 = vadd.f32 %v138, %v139
  %v141 = vrot.slane %v140, 1
  %v142 = vadd.f32 %v140, %v141
  %v143 = vmul.f32 %v142, 0.041666668
  %v144 = vmul.f32 %v128, %v128
  %v145 = vsub.f32 %v143, %v144
  %v146 = vld [vmem:[%s4] sm:$0x1]
  %v147 = vadd.f32 %v145, 1e-05
  %v148 = vrsqrt.pop %v147
  %v149 = vmul.f32 %v146, %v148
  %v150 = vld [vmem:[%s5] sm:$0x1]
  %v151 = vmul.f32 %v128, %v149
  %v152 = vsub.f32 %v150, %v151
  %v154 = vlaneseq
  %v155 = vshrl.u32 %v154, 7
  %v156 = vsub.s32 0, %v155
  %v157 = vrot.slane %v149, %v156
  %v159 = vmul.f32 %v113, %v157
  %v160 = vmul.f32 %v114, %v157
  %v161 = vmul.f32 %v115, %v157
  %v163 = vlaneseq
  %v164 = vshrl.u32 %v163, 7
  %v165 = vsub.s32 0, %v164
  %v166 = vrot.slane %v152, %v165
  %v168 = vadd.f32 %v159, %v166
  %v169 = vadd.f32 %v160, %v166
  %v170 = vadd.f32 %v161, %v166
  %v171 = vpack.c.bf16 %v110, %v109
  %v172 = vpack.c.bf16 %v112, %v111
  %v173 = vpack.c.bf16 %v169, %v168
  %v174 = vpack.c.bf16 %v170, %v170
  %v175 = vld [vmem:[%s6] sm:$0xf]
  %v176 = vld [vmem:[%s6 + $0x4] sm:$0xf]
  %v177 = vld [vmem:[%s6 + $0x8] sm:$0xf]
  %v178 = vld [vmem:[%s6 + $0xc] sm:$0xf]
  %v183 = vunpack.c.l.b16 %v175
  %v184 = vunpack.c.l.b16 %v176
  %v185 = vunpack.c.l.b16 %v177
  %v186 = vunpack.c.l.b16 %v178
  %v187 = vpack.c.b16 %v184, %v183
  %v188 = vpack.c.b16 %v186, %v185
  %vm189 = vcmask 195584
  %v191 = vsel %vm189, %v187, 0
  %v194 = vsel %vm189, %v188, 0
  %vm196 = vcmask 1043456
  %v198 = vsel %vm196, %v174, 0
  %200 = vmatprep.subr.bf16.mxu0 0
  %201 = vmatpush1.bf16.msra.mxu0 %v173
  %202 = vmatprep.subr.bf16.mxu0 0
  %203 = vmatpush1.bf16.msra.mxu0 %v198
  %204 = vmatprep.subr.bf16.mxu0 0
  %205 = vmatpush1.bf16.msra.mxu0 0
  %206 = vmatprep.subr.bf16.mxu0 0
  %207 = vmatpush1.bf16.msra.mxu0 0
  %208 = vmatprep.subr.bf16.mxu0 0
  %209 = vmatpush1.bf16.msra.mxu0 0
  %210 = vmatprep.subr.bf16.mxu0 0
  %211 = vmatpush1.bf16.msra.mxu0 0
  %212 = vmatprep.subr.bf16.mxu0 0
  %213 = vmatpush1.bf16.msra.mxu0 0
  %214 = vmatprep.subr.bf16.mxu0 0
  %215 = vmatpush1.bf16.msra.mxu0 0
  %216 = vmatprep.subr.bf16.mxu0 0
  %217 = vmatpush1.bf16.msra.mxu0 0
  %218 = vmatprep.subr.bf16.mxu0 0
  %219 = vmatpush1.bf16.msra.mxu0 0
  %220 = vmatprep.subr.bf16.mxu0 0
  %221 = vmatpush1.bf16.msra.mxu0 0
  %222 = vmatprep.subr.bf16.mxu0 0
  %223 = vmatpush1.bf16.msra.mxu0 0
  %224 = vmatprep.subr.bf16.mxu0 0
  %225 = vmatpush1.bf16.msra.mxu0 0
  %226 = vmatprep.subr.bf16.mxu0 0
  %227 = vmatpush1.bf16.msra.mxu0 0
  %228 = vmatprep.subr.bf16.mxu0 0
  %229 = vmatpush1.bf16.msra.mxu0 0
  %230 = vmatprep.subr.bf16.mxu0 0
  %231 = vmatpush1.bf16.msra.mxu0 0
  %232 = vmatprep.mubr.bf16.mxu0 0
  %233 = vmatmul.mubr.bf16.gmra.mrb[0].mxu0 %v191
  %v234 = vpop.f32.mrb[0].mxu0
  %v235 = vadd.f32 0.0, %v234
  %v236 = vpop.f32.mrb[0].mxu0
  %v237 = vpop.f32.mrb[0].mxu0
  %v238 = vadd.f32 0.0, %v237
  %v239 = vpop.f32.mrb[0].mxu0
  %240 = vmatprep.mubr.bf16.mxu0 0
  %241 = vmatmul.mubr.bf16.gmra.mrb[0].mxu0 %v194
  %v242 = vpop.f32.mrb[0].mxu0
  %v243 = vadd.f32 0.0, %v242
  %v244 = vpop.f32.mrb[0].mxu0
  %v245 = vpop.f32.mrb[0].mxu0
  %v246 = vadd.f32 0.0, %v245
  %v247 = vpop.f32.mrb[0].mxu0
  %248 = vdwg.mxu0
  %253 = vrot.lane.b32.xlu0 %v109, 8
  %v254 = vpop.permute.xlu0 %253
  %255 = vrot.lane.b32.xlu0 %v110, 8
  %v256 = vpop.permute.xlu0 %255
  %257 = vrot.lane.b32.xlu0 %v111, 8
  %v258 = vpop.permute.xlu0 %257
  %259 = vrot.lane.b32.xlu0 %v112, 8
  %v260 = vpop.permute.xlu0 %259
  %v265 = vsel %vm116, %v235, %v254
  %v266 = vsel %vm116, %v238, %v256
  %v267 = vsel %vm116, %v243, %v258
  %v268 = vsel %vm116, %v246, %v260
  %v269 = vpack.c.bf16 %v266, %v265
  %v270 = vpack.c.bf16 %v268, %v267
  %v271 = vld [vmem:[%s8] sm:$0xf]
  %v272 = vld [vmem:[%s8 + $0x4] sm:$0xf]
  %v273 = vld [vmem:[%s8 + $0x8] sm:$0xf]
  %v274 = vld [vmem:[%s9] sm:$0x1]
  %v276 = vlaneseq
  %v277 = vshrl.u32 %v276, 7
  %v278 = vsub.s32 0, %v277
  %v279 = vrot.slane %v274, %v278
  %v284 = vunpack.c.l.b16 %v271
  %v285 = vunpack.c.l.b16 %v272
  %v286 = vunpack.c.l.b16 %v273
  %v287 = vpack.c.b16 %v285, %v284
  %v288 = vpack.c.b16 %v286, %v286
  %v291 = vsel %vm189, %v269, 0
  %v294 = vsel %vm189, %v270, 0
  %v297 = vsel %vm196, %v288, 0
  %299 = vmatprep.subr.bf16.mxu0 0
  %300 = vmatpush1.bf16.msra.mxu0 %v287
  %301 = vmatprep.subr.bf16.mxu0 0
  %302 = vmatpush1.bf16.msra.mxu0 %v297
  %303 = vmatprep.subr.bf16.mxu0 0
  %304 = vmatpush1.bf16.msra.mxu0 0
  %305 = vmatprep.subr.bf16.mxu0 0
  %306 = vmatpush1.bf16.msra.mxu0 0
  %307 = vmatprep.subr.bf16.mxu0 0
  %308 = vmatpush1.bf16.msra.mxu0 0
  %309 = vmatprep.subr.bf16.mxu0 0
  %310 = vmatpush1.bf16.msra.mxu0 0
  %311 = vmatprep.subr.bf16.mxu0 0
  %312 = vmatpush1.bf16.msra.mxu0 0
  %313 = vmatprep.subr.bf16.mxu0 0
  %314 = vmatpush1.bf16.msra.mxu0 0
  %315 = vmatprep.subr.bf16.mxu0 0
  %316 = vmatpush1.bf16.msra.mxu0 0
  %317 = vmatprep.subr.bf16.mxu0 0
  %318 = vmatpush1.bf16.msra.mxu0 0
  %319 = vmatprep.subr.bf16.mxu0 0
  %320 = vmatpush1.bf16.msra.mxu0 0
  %321 = vmatprep.subr.bf16.mxu0 0
  %322 = vmatpush1.bf16.msra.mxu0 0
  %323 = vmatprep.subr.bf16.mxu0 0
  %324 = vmatpush1.bf16.msra.mxu0 0
  %325 = vmatprep.subr.bf16.mxu0 0
  %326 = vmatpush1.bf16.msra.mxu0 0
  %327 = vmatprep.subr.bf16.mxu0 0
  %328 = vmatpush1.bf16.msra.mxu0 0
  %329 = vmatprep.subr.bf16.mxu0 0
  %330 = vmatpush1.bf16.msra.mxu0 0
  %331 = vmatprep.mubr.bf16.mxu0 0
  %332 = vmatmul.mubr.bf16.gmra.mrb[0].mxu0 %v291
  %v333 = vpop.f32.mrb[0].mxu0
  %v334 = vadd.f32 %v279, %v333
  %v335 = vpop.f32.mrb[0].mxu0
  %v336 = vpop.f32.mrb[0].mxu0
  %v337 = vadd.f32 %v279, %v336
  %v338 = vpop.f32.mrb[0].mxu0
  %339 = vmatprep.mubr.bf16.mxu0 0
  %340 = vmatmul.mubr.bf16.gmra.mrb[0].mxu0 %v294
  %v341 = vpop.f32.mrb[0].mxu0
  %v342 = vadd.f32 %v279, %v341
  %v343 = vpop.f32.mrb[0].mxu0
  %v344 = vpop.f32.mrb[0].mxu0
  %v345 = vadd.f32 %v279, %v344
  %v346 = vpop.f32.mrb[0].mxu0
  %347 = vdwg.mxu0
  %v348 = vmax.f32 %v334, 0.0
  %v349 = vmax.f32 %v337, 0.0
  %v350 = vmax.f32 %v342, 0.0
  %v351 = vmax.f32 %v345, 0.0
  %352 = vst [vmem:[%s13] sm:$0xff] %v348
  %353 = vst [vmem:[%s13 + $0x8] sm:$0xff] %v349
  %354 = vst [vmem:[%s13 + $0x10] sm:$0xff] %v350
  %355 = vst [vmem:[%s13 + $0x18] sm:$0xff] %v351
  %v356 = vld [vmem:[%s10] sm:$0xf]
  %v357 = vld [vmem:[%s10 + $0x4] sm:$0xf]
  %v360 = vunpack.c.l.b16 %v356
  %v361 = vunpack.c.l.b16 %v357
  %v362 = vpack.c.b16 %v361, %v360
  %v365 = vsel %vm51, %v171, 0
  %v368 = vsel %vm51, %v172, 0
  %370 = vmatprep.subr.bf16.mxu0 0
  %371 = vmatpush1.bf16.msra.mxu0 %v362
  %372 = vmatprep.subr.bf16.mxu0 0
  %373 = vmatpush1.bf16.msra.mxu0 0
  %374 = vmatprep.subr.bf16.mxu0 0
  %375 = vmatpush1.bf16.msra.mxu0 0
  %376 = vmatprep.subr.bf16.mxu0 0
  %377 = vmatpush1.bf16.msra.mxu0 0
  %378 = vmatprep.subr.bf16.mxu0 0
  %379 = vmatpush1.bf16.msra.mxu0 0
  %380 = vmatprep.subr.bf16.mxu0 0
  %381 = vmatpush1.bf16.msra.mxu0 0
  %382 = vmatprep.subr.bf16.mxu0 0
  %383 = vmatpush1.bf16.msra.mxu0 0
  %384 = vmatprep.subr.bf16.mxu0 0
  %385 = vmatpush1.bf16.msra.mxu0 0
  %386 = vmatprep.subr.bf16.mxu0 0
  %387 = vmatpush1.bf16.msra.mxu0 0
  %388 = vmatprep.subr.bf16.mxu0 0
  %389 = vmatpush1.bf16.msra.mxu0 0
  %390 = vmatprep.subr.bf16.mxu0 0
  %391 = vmatpush1.bf16.msra.mxu0 0
  %392 = vmatprep.subr.bf16.mxu0 0
  %393 = vmatpush1.bf16.msra.mxu0 0
  %394 = vmatprep.subr.bf16.mxu0 0
  %395 = vmatpush1.bf16.msra.mxu0 0
  %396 = vmatprep.subr.bf16.mxu0 0
  %397 = vmatpush1.bf16.msra.mxu0 0
  %398 = vmatprep.subr.bf16.mxu0 0
  %399 = vmatpush1.bf16.msra.mxu0 0
  %400 = vmatprep.subr.bf16.mxu0 0
  %401 = vmatpush1.bf16.msra.mxu0 0
  %402 = vmatprep.mubr.bf16.mxu0 0
  %403 = vmatmul.mubr.bf16.gmra.mrb[0].mxu0 %v365
  %v404 = vpop.f32.mrb[0].mxu0
  %v405 = vadd.f32 0.0, %v404
  %v406 = vpop.f32.mrb[0].mxu0
  %v407 = vpop.f32.mrb[0].mxu0
  %v408 = vadd.f32 0.0, %v407
  %v409 = vpop.f32.mrb[0].mxu0
  %410 = vmatprep.mubr.bf16.mxu0 0
  %411 = vmatmul.mubr.bf16.gmra.mrb[0].mxu0 %v368
  %v412 = vpop.f32.mrb[0].mxu0
  %v413 = vadd.f32 0.0, %v412
  %v414 = vpop.f32.mrb[0].mxu0
  %v415 = vpop.f32.mrb[0].mxu0
  %v416 = vadd.f32 0.0, %v415
  %v417 = vpop.f32.mrb[0].mxu0
  %418 = vdwg.mxu0
  %v419 = vld [vmem:[%s7] sm:$0xf]
  %v420 = vld [vmem:[%s7 + $0x4] sm:$0xf]
  %v421 = vld [vmem:[%s7 + $0x8] sm:$0xf]
  %v422 = vpack.c.bf16 %v408, %v405
  %v423 = vpack.c.bf16 %v416, %v413
  %v424 = vld [vmem:[%s11] sm:$0xf]
  %v426 = vsel %vm116, %v173, 0
  %v428 = vsel %vm116, %v174, 0
  %v431 = vsel %vm196, %v424, 0
  %433 = vmatprep.subr.bf16.mxu0 0
  %434 = vmatpush1.bf16.msra.mxu0 %v431
  %435 = vmatprep.subr.bf16.mxu0 0
  %436 = vmatpush1.bf16.msra.mxu0 0
  %437 = vmatprep.subr.bf16.mxu0 0
  %438 = vmatpush1.bf16.msra.mxu0 0
  %439 = vmatprep.subr.bf16.mxu0 0
  %440 = vmatpush1.bf16.msra.mxu0 0
  %441 = vmatprep.subr.bf16.mxu0 0
  %442 = vmatpush1.bf16.msra.mxu0 0
  %443 = vmatprep.subr.bf16.mxu0 0
  %444 = vmatpush1.bf16.msra.mxu0 0
  %445 = vmatprep.subr.bf16.mxu0 0
  %446 = vmatpush1.bf16.msra.mxu0 0
  %447 = vmatprep.subr.bf16.mxu0 0
  %448 = vmatpush1.bf16.msra.mxu0 0
  %449 = vmatprep.subr.bf16.mxu0 0
  %450 = vmatpush1.bf16.msra.mxu0 0
  %451 = vmatprep.subr.bf16.mxu0 0
  %452 = vmatpush1.bf16.msra.mxu0 0
  %453 = vmatprep.subr.bf16.mxu0 0
  %454 = vmatpush1.bf16.msra.mxu0 0
  %455 = vmatprep.subr.bf16.mxu0 0
  %456 = vmatpush1.bf16.msra.mxu0 0
  %457 = vmatprep.subr.bf16.mxu0 0
  %458 = vmatpush1.bf16.msra.mxu0 0
  %459 = vmatprep.subr.bf16.mxu0 0
  %460 = vmatpush1.bf16.msra.mxu0 0
  %461 = vmatprep.subr.bf16.mxu0 0
  %462 = vmatpush1.bf16.msra.mxu0 0
  %463 = vmatprep.subr.bf16.mxu0 0
  %464 = vmatpush1.bf16.msra.mxu0 0
  %465 = vmatprep.mubr.bf16.mxu0 0
  %466 = vmatmul.mubr.bf16.gmra.mrb[0].mxu0 %v426
  %v467 = vpop.f32.mrb[0].mxu0
  %v468 = vadd.f32 0.0, %v467
  %v469 = vpop.f32.mrb[0].mxu0
  %v470 = vpop.f32.mrb[0].mxu0
  %v471 = vadd.f32 0.0, %v470
  %v472 = vpop.f32.mrb[0].mxu0
  %473 = vmatprep.mubr.bf16.mxu0 0
  %474 = vmatmul.mubr.bf16.gmra.mrb[0].mxu0 %v428
  %v475 = vpop.f32.mrb[0].mxu0
  %v476 = vadd.f32 0.0, %v475
  %v477 = vpop.f32.mrb[0].mxu0
  %v478 = vpop.f32.mrb[0].mxu0
  %v479 = vpop.f32.mrb[0].mxu0
  %480 = vdwg.mxu0
  %v484 = vunpack.c.l.b16 %v419
  %v485 = vunpack.c.l.b16 %v420
  %v486 = vunpack.c.l.b16 %v421
  %v487 = vpack.c.b16 %v485, %v484
  %v488 = vpack.c.b16 %v486, %v486
  %vm489 = vcmask 261120
  %v491 = vsel %vm489, %v487, 0
  %v494 = vsel %vm489, %v488, 0
  %496 = vmatprep.subr.bf16.mxu0 0
  %497 = vmatpush1.bf16.msra.mxu0 %v422
  %498 = vmatprep.subr.bf16.mxu0 0
  %499 = vmatpush1.bf16.msra.mxu0 %v423
  %500 = vmatprep.subr.bf16.mxu0 0
  %501 = vmatpush1.bf16.msra.mxu0 0
  %502 = vmatprep.subr.bf16.mxu0 0
  %503 = vmatpush1.bf16.msra.mxu0 0
  %504 = vmatprep.subr.bf16.mxu0 0
  %505 = vmatpush1.bf16.msra.mxu0 0
  %506 = vmatprep.subr.bf16.mxu0 0
  %507 = vmatpush1.bf16.msra.mxu0 0
  %508 = vmatprep.subr.bf16.mxu0 0
  %509 = vmatpush1.bf16.msra.mxu0 0
  %510 = vmatprep.subr.bf16.mxu0 0
  %511 = vmatpush1.bf16.msra.mxu0 0
  %512 = vmatprep.subr.bf16.mxu0 0
  %513 = vmatpush1.bf16.msra.mxu0 0
  %514 = vmatprep.subr.bf16.mxu0 0
  %515 = vmatpush1.bf16.msra.mxu0 0
  %516 = vmatprep.subr.bf16.mxu0 0
  %517 = vmatpush1.bf16.msra.mxu0 0
  %518 = vmatprep.subr.bf16.mxu0 0
  %519 = vmatpush1.bf16.msra.mxu0 0
  %520 = vmatprep.subr.bf16.mxu0 0
  %521 = vmatpush1.bf16.msra.mxu0 0
  %522 = vmatprep.subr.bf16.mxu0 0
  %523 = vmatpush1.bf16.msra.mxu0 0
  %524 = vmatprep.subr.bf16.mxu0 0
  %525 = vmatpush1.bf16.msra.mxu0 0
  %526 = vmatprep.subr.bf16.mxu0 0
  %527 = vmatpush1.bf16.msra.mxu0 0
  %528 = vmatprep.mubr.bf16.mxu0 0
  %529 = vmatmul.mubr.bf16.gmra.mrb[0].mxu0 %v491
  %v530 = vpop.f32.mrb[0].mxu0
  %v531 = vadd.f32 %v468, %v530
  %v532 = vpop.f32.mrb[0].mxu0
  %v533 = vpop.f32.mrb[0].mxu0
  %v534 = vadd.f32 %v471, %v533
  %v535 = vpop.f32.mrb[0].mxu0
  %536 = vmatprep.mubr.bf16.mxu0 0
  %537 = vmatmul.mubr.bf16.gmra.mrb[0].mxu0 %v494
  %v538 = vpop.f32.mrb[0].mxu0
  %v539 = vadd.f32 %v476, %v538
  %v540 = vpop.f32.mrb[0].mxu0
  %v541 = vpop.f32.mrb[0].mxu0
  %v542 = vpop.f32.mrb[0].mxu0
  %543 = vdwg.mxu0
  %v544 = vld [vmem:[%s12] sm:$0x1]
  %v546 = vlaneseq
  %v547 = vshrl.u32 %v546, 7
  %v548 = vsub.s32 0, %v547
  %v549 = vrot.slane %v544, %v548
  %v551 = vadd.f32 %v531, %v549
  %v552 = vadd.f32 %v534, %v549
  %v553 = vadd.f32 %v539, %v549
  %v554 = vmax.f32 %v551, 0.0
  %v555 = vmax.f32 %v552, 0.0
  %v556 = vmax.f32 %v553, 0.0
  %557 = vst [vmem:[%s14] sm:$0xff] %v554
  %558 = vst [vmem:[%s14 + $0x8] sm:$0xff] %v555
  %559 = vst [vmem:[%s14 + $0x10] sm:$0xff] %v556
  // Predicated region
  $region54: #{gnn_fwd.1} parent=0 // pred_check
    _
  $region55: #{gnn_fwd.1} parent=0 // pred_check_branch
    %561 = sbr.rel (0) target = $region57
  $region56: #{gnn_fwd.1} parent=0 // pred_region
    _
  $region57: #{gnn_fwd.1} parent=0 // pred_fallthru
    _
  // Predicated region
  $region58: #{gnn_fwd.1} parent=0 // pred_check
    _
  $region59: #{gnn_fwd.1} parent=0 // pred_check_branch
    %563 = sbr.rel (0) target = $region61
  $region60: #{gnn_fwd.1} parent=0 // pred_region
    _
  $region61: #{gnn_fwd.1} parent=0 // pred_fallthru
    _
  // Predicated region
  $region62: #{gnn_fwd.1} parent=0 // pred_check
    _
  $region63: #{gnn_fwd.1} parent=0 // pred_check_branch
    %565 = sbr.rel (0) target = $region65
  $region64: #{gnn_fwd.1} parent=0 // pred_region
    _
  $region65: #{gnn_fwd.1} parent=0 // pred_fallthru
    _
  // Predicated region
  $region66: #{gnn_fwd.1} parent=0 // pred_check
    _
  $region67: #{gnn_fwd.1} parent=0 // pred_check_branch
    %567 = sbr.rel (0) target = $region69
  $region68: #{gnn_fwd.1} parent=0 // pred_region
    _
  $region69: #{gnn_fwd.1} parent=0 // pred_fallthru
    _

</llo_original>
